<compile_context>
chip_gen: v7x
topology: tpu7x:2x2x1
jax: 0.10.0
libtpu: 0.0.40
codegen_flags: <defaults>
</compile_context>

<pallas_src>
import functools

import jax
import jax.numpy as jnp
from jax.experimental import pallas as pl
from jax.experimental.pallas import tpu as pltpu


def _glu_kernel(x_ref, w_ref, b_ref, o_ref, *, c_out, use_mxu, b_tile):
    """One (batch-tile, pixel-tile) grid step.

    x_ref: (b_tile, C_in, t_pix)   pixels in lanes
    w_ref: (2*C_out, C_in)         fused [map; gate] weights (out x in)
    b_ref: (2*C_out, 1)            fused biases
    o_ref: (b_tile, C_out, t_pix)  written directly in N,C,(H*W) layout
    """
    w = w_ref[...].astype(jnp.float32)      # (2*C_out, C_in)
    bias = b_ref[...].astype(jnp.float32)   # (2*C_out, 1)
    c_in = w.shape[1]

    def one_batch(i):
        x = x_ref[i]                        # (C_in, t_pix)
        if use_mxu:
            acc = jnp.dot(w, x, preferred_element_type=jnp.float32) + bias
        else:
            # Tiny contraction: unrolled VPU broadcast-FMA in exact f32.
            # Accumulator seeded from channel 0 (no zeros init + extra add).
            xf = x.astype(jnp.float32)
            acc = w[:, 0:1] * xf[0:1, :] + bias
            for c in range(1, c_in):
                acc = acc + w[:, c:c + 1] * xf[c:c + 1, :]
        y = acc[:c_out, :]                  # map projection
        g = acc[c_out:, :]                  # gate projection
        o_ref[i] = (y * jax.nn.sigmoid(g)).astype(o_ref.dtype)

    if b_tile <= 8:
        for i in range(b_tile):             # static unroll (LLO-visible)
            one_batch(i)
    else:
        @pl.loop(0, b_tile)
        def _(i):
            one_batch(i)


# VMEM budget for the double-buffered x+out blocks: conservative enough for
# v7x (64 MiB physical), raised explicitly past v5e's 16 MiB scoped default.
_VMEM_BLOCK_BUDGET = 24 * 1024 * 1024
_VMEM_LIMIT_CAP = 48 * 1024 * 1024


@jax.jit
def glu2d(x_nchw, w, b, wg, bg):
    """GLU2d forward: Conv1x1(x) * sigmoid(Conv1x1_gate(x)).

    Args:
      x_nchw: (N, C_in, H, W)
      w, wg:  (C_in, C_out) 1x1-conv weights (in x out)
      b, bg:  (C_out,) biases
    Returns:
      (N, C_out, H, W), same dtype as x.
    """
    N, C_in, H, W = x_nchw.shape
    C_out = w.shape[1]
    HW = H * W
    ebytes = x_nchw.dtype.itemsize

    # --- tile sizing from the VMEM budget -------------------------------------
    bytes_per_pix = ebytes * (C_in + C_out)          # x + out, per pixel, per buffer
    max_pix_per_block = max(128, _VMEM_BLOCK_BUDGET // (2 * bytes_per_pix))

    if HW <= max_pix_per_block:
        # Small feature map: whole pixel row, tile over batch so each DMA is a
        # single large contiguous chunk of HBM.
        t_pix = HW
        b_tile = max(1, min(N, max_pix_per_block // HW))
        if N > 1 and b_tile >= N:
            # Keep >= 2 grid steps (megacore / v7x dual-TC) when each half
            # still moves a roofline-friendly amount of data.
            half_n = -(-N // 2)
            if half_n * C_in * HW * ebytes >= (1 << 20):
                b_tile = half_n
        if N == 1 and HW >= 256 and C_in * HW * ebytes >= (1 << 20):
            # v7x: single batch, single tile -> split the pixel axis instead.
            t_pix = max(128, ((HW // 2) // 128) * 128)
    else:
        # Large feature map: lane-dense pixel tiles, one batch per step.
        b_tile = 1
        t_pix = max(128, (max_pix_per_block // 128) * 128)

    n_b_tiles = pl.cdiv(N, b_tile)
    n_p_tiles = pl.cdiv(HW, t_pix)

    # --- fused weights / bias --------------------------------------------------
    x3d = x_nchw.reshape(N, C_in, HW)                 # free view reshape, no transpose
    w_cat = jnp.concatenate([w.T, wg.T], axis=0)      # (2*C_out, C_in)
    b_cat = jnp.concatenate([b, bg], axis=0).reshape(2 * C_out, 1)

    # --- MXU vs VPU: total MAC work, not C_in alone ----------------------------
    use_mxu = (2 * C_out * C_in) >= 128

    # --- pipeline depth and matching VMEM limit --------------------------------
    in_block_bytes = b_tile * C_in * t_pix * ebytes
    out_block_bytes = b_tile * C_out * t_pix * ebytes
    deep_pipeline = (in_block_bytes < (512 * 1024)) and (n_b_tiles * n_p_tiles >= 4)
    n_in_bufs = 3 if deep_pipeline else 2
    w_bytes = w_cat.size * w_cat.dtype.itemsize
    bias_bytes = b_cat.size * b_cat.dtype.itemsize
    pipeline_bytes = (n_in_bufs * in_block_bytes + 2 * out_block_bytes
                      + 2 * (w_bytes + bias_bytes))
    vmem_limit_bytes = int(min(max(pipeline_bytes + (4 << 20), 16 << 20),
                               _VMEM_LIMIT_CAP))

    x_spec_kwargs = {}
    if deep_pipeline:
        x_spec_kwargs["pipeline_mode"] = pl.Buffered(3)

    kernel = functools.partial(_glu_kernel, c_out=C_out, use_mxu=use_mxu,
                               b_tile=b_tile)

    out3d = pl.pallas_call(
        kernel,
        out_shape=jax.ShapeDtypeStruct((N, C_out, HW), x_nchw.dtype),
        grid_spec=pltpu.PrefetchScalarGridSpec(
            num_scalar_prefetch=0,
            grid=(n_b_tiles, n_p_tiles),
            in_specs=[
                pl.BlockSpec((b_tile, C_in, t_pix),
                             lambda nb, t: (nb, 0, t), **x_spec_kwargs),   # x slab
                pl.BlockSpec((2 * C_out, C_in), lambda nb, t: (0, 0)),     # fused W
                pl.BlockSpec((2 * C_out, 1), lambda nb, t: (0, 0)),        # fused b
            ],
            out_specs=pl.BlockSpec((b_tile, C_out, t_pix),
                                   lambda nb, t: (nb, 0, t)),
        ),
        compiler_params=pltpu.CompilerParams(
            dimension_semantics=("parallel", "parallel"),
            vmem_limit_bytes=vmem_limit_bytes),
    )(x3d, w_cat, b_cat)

    # (N, C_out, H*W) -> (N, C_out, H, W): free view reshape, already NCHW.
    return out3d.reshape(N, C_out, H, W)


def _reference(x_nchw, w, b, wg, bg):
    # Pure-JAX reference in exact f32 (elementwise multiply + sum, no MXU).
    x = jnp.transpose(x_nchw, (0, 2, 3, 1))                # NHWC
    y = jnp.sum(x[..., :, None] * w, axis=-2) + b
    g = jnp.sum(x[..., :, None] * wg, axis=-2) + bg
    out = y * jax.nn.sigmoid(g)
    return jnp.transpose(out, (0, 3, 1, 2))


if __name__ == "__main__":
    batch, in_channels, out_channels, H, W = 2, 4, 8, 16, 16

    key = jax.random.PRNGKey(0)
    kx, kw, kb, kwg, kbg = jax.random.split(key, 5)

    x = jax.random.normal(kx, (batch, in_channels, H, W), dtype=jnp.float32)
    # Synthetic params matching Conv2d 1x1 shapes (out, in, 1, 1), stored (in, out).
    scale = 1.0 / (in_channels ** 0.5)
    w = jax.random.uniform(kw, (in_channels, out_channels), jnp.float32,
                           -scale, scale)
    b = jax.random.uniform(kb, (out_channels,), jnp.float32, -scale, scale)
    wg = jax.random.uniform(kwg, (in_channels, out_channels), jnp.float32,
                            -scale, scale)
    bg = jax.random.uniform(kbg, (out_channels,), jnp.float32, -scale, scale)

    out = glu2d(x, w, b, wg, bg)
    jax.block_until_ready(out)

    ref = _reference(x, w, b, wg, bg)
    assert out.shape == (batch, out_channels, H, W)
    assert jnp.allclose(out, ref, atol=1e-5, rtol=1e-5)

    print("KERNEL_OK")
</pallas_src>

<mosaic_0001>
module attributes {stable_mosaic.version = 11 : i64} {
  func.func @_glu_kernel(%arg0: i32, %arg1: i32, %arg2: memref<2x4x256xf32, #tpu.memory_space<vmem>>, %arg3: memref<16x4xf32, #tpu.memory_space<vmem>>, %arg4: memref<16x1xf32, #tpu.memory_space<vmem>>, %arg5: memref<2x8x256xf32, #tpu.memory_space<vmem>>) attributes {dimension_semantics = [#tpu.dimension_semantics<parallel>, #tpu.dimension_semantics<parallel>], iteration_bounds = array<i64: 1, 1>, scalar_prefetch = 0 : i64, scratch_operands = 0 : i64, tpu.core_type = #tpu.core_type<tc>, window_params = [{transform_indices = @transform_0, window_bounds = array<i64: 2, 4, 256>}, {pipeline_mode = #tpu.pipeline_mode<synchronous>, transform_indices = @transform_1, window_bounds = array<i64: 16, 4>}, {pipeline_mode = #tpu.pipeline_mode<synchronous>, transform_indices = @transform_2, window_bounds = array<i64: 16, 1>}, {transform_indices = @transform_3, window_bounds = array<i64: 2, 8, 256>}]} {
    %c0 = arith.constant 0 : index
    %c0_0 = arith.constant 0 : index
    %0 = vector.load %arg3[%c0, %c0_0] : memref<16x4xf32, #tpu.memory_space<vmem>>, vector<16x4xf32>
    %c0_1 = arith.constant 0 : index
    %c0_2 = arith.constant 0 : index
    %1 = vector.load %arg4[%c0_1, %c0_2] : memref<16x1xf32, #tpu.memory_space<vmem>>, vector<16x1xf32>
    %c0_3 = arith.constant 0 : index
    %c0_4 = arith.constant 0 : index
    %c0_5 = arith.constant 0 : index
    %2 = vector.load %arg2[%c0_3, %c0_4, %c0_5] : memref<2x4x256xf32, #tpu.memory_space<vmem>>, vector<1x4x256xf32>
    %3 = vector.shape_cast %2 : vector<1x4x256xf32> to vector<4x256xf32>
    %4 = vector.extract_strided_slice %0 {offsets = [0, 0], sizes = [16, 1], strides = [1, 1]} : vector<16x4xf32> to vector<16x1xf32>
    %5 = vector.extract_strided_slice %3 {offsets = [0, 0], sizes = [1, 256], strides = [1, 1]} : vector<4x256xf32> to vector<1x256xf32>
    %6 = vector.broadcast %4 : vector<16x1xf32> to vector<16x256xf32>
    %7 = vector.broadcast %5 : vector<1x256xf32> to vector<16x256xf32>
    %8 = arith.mulf %6, %7 : vector<16x256xf32>
    %9 = vector.broadcast %1 : vector<16x1xf32> to vector<16x256xf32>
    %10 = arith.addf %8, %9 : vector<16x256xf32>
    %11 = vector.extract_strided_slice %0 {offsets = [0, 1], sizes = [16, 1], strides = [1, 1]} : vector<16x4xf32> to vector<16x1xf32>
    %12 = vector.extract_strided_slice %3 {offsets = [1, 0], sizes = [1, 256], strides = [1, 1]} : vector<4x256xf32> to vector<1x256xf32>
    %13 = vector.broadcast %11 : vector<16x1xf32> to vector<16x256xf32>
    %14 = vector.broadcast %12 : vector<1x256xf32> to vector<16x256xf32>
    %15 = arith.mulf %13, %14 : vector<16x256xf32>
    %16 = arith.addf %10, %15 : vector<16x256xf32>
    %17 = vector.extract_strided_slice %0 {offsets = [0, 2], sizes = [16, 1], strides = [1, 1]} : vector<16x4xf32> to vector<16x1xf32>
    %18 = vector.extract_strided_slice %3 {offsets = [2, 0], sizes = [1, 256], strides = [1, 1]} : vector<4x256xf32> to vector<1x256xf32>
    %19 = vector.broadcast %17 : vector<16x1xf32> to vector<16x256xf32>
    %20 = vector.broadcast %18 : vector<1x256xf32> to vector<16x256xf32>
    %21 = arith.mulf %19, %20 : vector<16x256xf32>
    %22 = arith.addf %16, %21 : vector<16x256xf32>
    %23 = vector.extract_strided_slice %0 {offsets = [0, 3], sizes = [16, 1], strides = [1, 1]} : vector<16x4xf32> to vector<16x1xf32>
    %24 = vector.extract_strided_slice %3 {offsets = [3, 0], sizes = [1, 256], strides = [1, 1]} : vector<4x256xf32> to vector<1x256xf32>
    %25 = vector.broadcast %23 : vector<16x1xf32> to vector<16x256xf32>
    %26 = vector.broadcast %24 : vector<1x256xf32> to vector<16x256xf32>
    %27 = arith.mulf %25, %26 : vector<16x256xf32>
    %28 = arith.addf %22, %27 : vector<16x256xf32>
    %29 = vector.extract_strided_slice %28 {offsets = [0, 0], sizes = [8, 256], strides = [1, 1]} : vector<16x256xf32> to vector<8x256xf32>
    %30 = vector.extract_strided_slice %28 {offsets = [8, 0], sizes = [8, 256], strides = [1, 1]} : vector<16x256xf32> to vector<8x256xf32>
    %31 = arith.negf %30 : vector<8x256xf32>
    %32 = math.exp %31 : vector<8x256xf32>
    %cst = arith.constant 1.000000e+00 : f32
    %33 = vector.broadcast %cst : f32 to vector<8x256xf32>
    %34 = arith.addf %33, %32 : vector<8x256xf32>
    %35 = arith.divf %33, %34 : vector<8x256xf32>
    %36 = arith.mulf %29, %35 : vector<8x256xf32>
    %c0_6 = arith.constant 0 : index
    %c0_7 = arith.constant 0 : index
    %c0_8 = arith.constant 0 : index
    %37 = vector.load %arg5[%c0_6, %c0_7, %c0_8] : memref<2x8x256xf32, #tpu.memory_space<vmem>>, vector<1x8x256xf32>
    %38 = vector.shape_cast %37 : vector<1x8x256xf32> to vector<8x256xf32>
    %39 = vector.shape_cast %36 : vector<8x256xf32> to vector<1x8x256xf32>
    tpu.vector_store %arg5[%c0_6, %c0_7, %c0_8], %39 {strides = array<i32>} : memref<2x8x256xf32, #tpu.memory_space<vmem>>, vector<1x8x256xf32>,
    %c1 = arith.constant 1 : index
    %c0_9 = arith.constant 0 : index
    %c0_10 = arith.constant 0 : index
    %40 = vector.load %arg2[%c1, %c0_9, %c0_10] : memref<2x4x256xf32, #tpu.memory_space<vmem>>, vector<1x4x256xf32>
    %41 = vector.shape_cast %40 : vector<1x4x256xf32> to vector<4x256xf32>
    %42 = vector.extract_strided_slice %0 {offsets = [0, 0], sizes = [16, 1], strides = [1, 1]} : vector<16x4xf32> to vector<16x1xf32>
    %43 = vector.extract_strided_slice %41 {offsets = [0, 0], sizes = [1, 256], strides = [1, 1]} : vector<4x256xf32> to vector<1x256xf32>
    %44 = vector.broadcast %42 : vector<16x1xf32> to vector<16x256xf32>
    %45 = vector.broadcast %43 : vector<1x256xf32> to vector<16x256xf32>
    %46 = arith.mulf %44, %45 : vector<16x256xf32>
    %47 = vector.broadcast %1 : vector<16x1xf32> to vector<16x256xf32>
    %48 = arith.addf %46, %47 : vector<16x256xf32>
    %49 = vector.extract_strided_slice %0 {offsets = [0, 1], sizes = [16, 1], strides = [1, 1]} : vector<16x4xf32> to vector<16x1xf32>
    %50 = vector.extract_strided_slice %41 {offsets = [1, 0], sizes = [1, 256], strides = [1, 1]} : vector<4x256xf32> to vector<1x256xf32>
    %51 = vector.broadcast %49 : vector<16x1xf32> to vector<16x256xf32>
    %52 = vector.broadcast %50 : vector<1x256xf32> to vector<16x256xf32>
    %53 = arith.mulf %51, %52 : vector<16x256xf32>
    %54 = arith.addf %48, %53 : vector<16x256xf32>
    %55 = vector.extract_strided_slice %0 {offsets = [0, 2], sizes = [16, 1], strides = [1, 1]} : vector<16x4xf32> to vector<16x1xf32>
    %56 = vector.extract_strided_slice %41 {offsets = [2, 0], sizes = [1, 256], strides = [1, 1]} : vector<4x256xf32> to vector<1x256xf32>
    %57 = vector.broadcast %55 : vector<16x1xf32> to vector<16x256xf32>
    %58 = vector.broadcast %56 : vector<1x256xf32> to vector<16x256xf32>
    %59 = arith.mulf %57, %58 : vector<16x256xf32>
    %60 = arith.addf %54, %59 : vector<16x256xf32>
    %61 = vector.extract_strided_slice %0 {offsets = [0, 3], sizes = [16, 1], strides = [1, 1]} : vector<16x4xf32> to vector<16x1xf32>
    %62 = vector.extract_strided_slice %41 {offsets = [3, 0], sizes = [1, 256], strides = [1, 1]} : vector<4x256xf32> to vector<1x256xf32>
    %63 = vector.broadcast %61 : vector<16x1xf32> to vector<16x256xf32>
    %64 = vector.broadcast %62 : vector<1x256xf32> to vector<16x256xf32>
    %65 = arith.mulf %63, %64 : vector<16x256xf32>
    %66 = arith.addf %60, %65 : vector<16x256xf32>
    %67 = vector.extract_strided_slice %66 {offsets = [0, 0], sizes = [8, 256], strides = [1, 1]} : vector<16x256xf32> to vector<8x256xf32>
    %68 = vector.extract_strided_slice %66 {offsets = [8, 0], sizes = [8, 256], strides = [1, 1]} : vector<16x256xf32> to vector<8x256xf32>
    %69 = arith.negf %68 : vector<8x256xf32>
    %70 = math.exp %69 : vector<8x256xf32>
    %cst_11 = arith.constant 1.000000e+00 : f32
    %71 = vector.broadcast %cst_11 : f32 to vector<8x256xf32>
    %72 = arith.addf %71, %70 : vector<8x256xf32>
    %73 = arith.divf %71, %72 : vector<8x256xf32>
    %74 = arith.mulf %67, %73 : vector<8x256xf32>
    %c1_12 = arith.constant 1 : index
    %c0_13 = arith.constant 0 : index
    %c0_14 = arith.constant 0 : index
    %75 = vector.load %arg5[%c1_12, %c0_13, %c0_14] : memref<2x8x256xf32, #tpu.memory_space<vmem>>, vector<1x8x256xf32>
    %76 = vector.shape_cast %75 : vector<1x8x256xf32> to vector<8x256xf32>
    %77 = vector.shape_cast %74 : vector<8x256xf32> to vector<1x8x256xf32>
    tpu.vector_store %arg5[%c1_12, %c0_13, %c0_14], %77 {strides = array<i32>} : memref<2x8x256xf32, #tpu.memory_space<vmem>>, vector<1x8x256xf32>,
    return
  }
  func.func @transform_0(%arg0: i32, %arg1: i32) -> (i32, i32, i32) {
    %c0_i32 = arith.constant 0 : i32
    %c0_i32_0 = arith.constant 0 : i32
    return %arg0, %c0_i32, %arg1 : i32, i32, i32
  }
  func.func @transform_1(%arg0: i32, %arg1: i32) -> (i32, i32) {
    %c0_i32 = arith.constant 0 : i32
    %c0_i32_0 = arith.constant 0 : i32
    %c0_i32_1 = arith.constant 0 : i32
    return %c0_i32, %c0_i32_0 : i32, i32
  }
  func.func @transform_2(%arg0: i32, %arg1: i32) -> (i32, i32) {
    %c0_i32 = arith.constant 0 : i32
    %c0_i32_0 = arith.constant 0 : i32
    %c0_i32_1 = arith.constant 0 : i32
    return %c0_i32, %c0_i32_0 : i32, i32
  }
  func.func @transform_3(%arg0: i32, %arg1: i32) -> (i32, i32, i32) {
    %c0_i32 = arith.constant 0 : i32
    %c0_i32_0 = arith.constant 0 : i32
    return %arg0, %c0_i32, %arg1 : i32, i32, i32
  }
}

</mosaic_0001>

<llo_original>
// kernel: glu2d.1
$region0: #{glu2d.1}
  #allocation0 [shape = 'u32[]', space=smem, size = 0x4, offset = 0x4, fixed_abs, tag = 'smem constant byte address 0x4 - core index']
  #allocation1 [shape = 'u32[144,128]{1,0:T(1,128)}', space=vmem, size = 0x12000, scoped, tag = 'internal scratch']
  %s0 = inlined_call_operand.vmem [shape: f32[2,4,256], index: 0, kind: input, shape index: {}]
  %s1 = inlined_call_operand.vmem [shape: f32[16,4], index: 1, kind: input, shape index: {}]
  %s2 = inlined_call_operand.vmem [shape: f32[16,1], index: 2, kind: input, shape index: {}]
  %s3 = inlined_call_operand.vmem [shape: f32[2,8,256], index: 3, kind: output, shape index: {}]
  %s4 = sld [smem:[#allocation0]]
  $region22: #{glu2d.1} parent=0
    _
  %s6 = ssub.s32 1, %s4
  %s7 = scalar_select 0, %s6, %s4
  // Predicated region
  $region2: #{glu2d.1} parent=0 // pred_check
    _
  $region3: #{glu2d.1} parent=0 // pred_check_branch
    %9 = sbr.rel (0) target = $region5
  $region4: #{glu2d.1} parent=0 // pred_region
    _
  $region5: #{glu2d.1} parent=0 // pred_fallthru
    _
  // Predicated region
  $region6: #{glu2d.1} parent=0 // pred_check
    _
  $region7: #{glu2d.1} parent=0 // pred_check_branch
    %11 = sbr.rel (0) target = $region9
  $region8: #{glu2d.1} parent=0 // pred_region
    _
  $region9: #{glu2d.1} parent=0 // pred_fallthru
    _
  // Predicated region
  $region10: #{glu2d.1} parent=0 // pred_check
    _
  $region11: #{glu2d.1} parent=0 // pred_check_branch
    %13 = sbr.rel (0) target = $region13
  $region12: #{glu2d.1} parent=0 // pred_region
    _
  $region13: #{glu2d.1} parent=0 // pred_fallthru
    _
  %v14 = vld [vmem:[%s1] sm:$0xff]
  %v15 = vld [vmem:[%s1 + $0x8] sm:$0xff]
  %v16 = vld [vmem:[%s2] sm:$0xff]
  %v17 = vld [vmem:[%s2 + $0x8] sm:$0xff]
  %v18 = vld [vmem:[%s0] sm:$0xff]
  %20 = vset.pattern.permute.xlu0 0
  %21 = vperm.xlu0 %20, %v14
  %v22 = vpop.permute.xlu0 %21
  %25 = vset.pattern.permute.xlu0 0
  %26 = vperm.xlu0 %25, %v15
  %v27 = vpop.permute.xlu0 %26
  %v30 = vlaneseq
  %v31 = vshrl.u32 %v30, 7
  %v32 = vsub.s32 0, %v31
  %v33 = vrot.slane %v18, %v32
  %v34 = vlaneseq
  %v35 = vshrl.u32 %v34, 7
  %v36 = vsub.s32 4, %v35
  %v37 = vrot.slane %v18, %v36
  %v40 = vlaneseq
  %v41 = vshrl.u32 %v40, 7
  %v42 = vsub.s32 0, %v41
  %v43 = vrot.slane %v33, %v42
  %v44 = vlaneseq
  %v45 = vshrl.u32 %v44, 7
  %v46 = vsub.s32 0, %v45
  %v47 = vrot.slane %v37, %v46
  %v48 = vmul.f32 %v22, %v43
  %v49 = vmul.f32 %v22, %v47
  %v50 = vmul.f32 %v27, %v43
  %v51 = vmul.f32 %v27, %v47
  %53 = vset.pattern.permute.xlu0 0
  %54 = vperm.xlu0 %53, %v16
  %v55 = vpop.permute.xlu0 %54
  %58 = vset.pattern.permute.xlu0 0
  %59 = vperm.xlu0 %58, %v17
  %v60 = vpop.permute.xlu0 %59
  %v62 = vadd.f32 %v48, %v55
  %v63 = vadd.f32 %v49, %v55
  %v64 = vadd.f32 %v50, %v60
  %v65 = vadd.f32 %v51, %v60
  %66 = vset.pattern.permute.xlu0 1
  %67 = vperm.xlu0 %66, %v14
  %v68 = vpop.permute.xlu0 %67
  %70 = vset.pattern.permute.xlu0 1
  %71 = vperm.xlu0 %70, %v15
  %v72 = vpop.permute.xlu0 %71
  %v74 = vlaneseq
  %v75 = vshrl.u32 %v74, 7
  %v76 = vsub.s32 1, %v75
  %v77 = vrot.slane %v18, %v76
  %v78 = vlaneseq
  %v79 = vshrl.u32 %v78, 7
  %v80 = vsub.s32 5, %v79
  %v81 = vrot.slane %v18, %v80
  %v84 = vlaneseq
  %v85 = vshrl.u32 %v84, 7
  %v86 = vsub.s32 1, %v85
  %v87 = vrot.slane %v77, %v86
  %v88 = vlaneseq
  %v89 = vshrl.u32 %v88, 7
  %v90 = vsub.s32 1, %v89
  %v91 = vrot.slane %v81, %v90
  %v92 = vmul.f32 %v68, %v87
  %v93 = vmul.f32 %v68, %v91
  %v94 = vmul.f32 %v72, %v87
  %v95 = vmul.f32 %v72, %v91
  %v96 = vadd.f32 %v62, %v92
  %v97 = vadd.f32 %v63, %v93
  %v98 = vadd.f32 %v64, %v94
  %v99 = vadd.f32 %v65, %v95
  %100 = vset.pattern.permute.xlu0 2
  %101 = vperm.xlu0 %100, %v14
  %v102 = vpop.permute.xlu0 %101
  %104 = vset.pattern.permute.xlu0 2
  %105 = vperm.xlu0 %104, %v15
  %v106 = vpop.permute.xlu0 %105
  %v108 = vlaneseq
  %v109 = vshrl.u32 %v108, 7
  %v110 = vsub.s32 2, %v109
  %v111 = vrot.slane %v18, %v110
  %v112 = vlaneseq
  %v113 = vshrl.u32 %v112, 7
  %v114 = vsub.s32 6, %v113
  %v115 = vrot.slane %v18, %v114
  %v118 = vlaneseq
  %v119 = vshrl.u32 %v118, 7
  %v120 = vsub.s32 2, %v119
  %v121 = vrot.slane %v111, %v120
  %v122 = vlaneseq
  %v123 = vshrl.u32 %v122, 7
  %v124 = vsub.s32 2, %v123
  %v125 = vrot.slane %v115, %v124
  %v126 = vmul.f32 %v102, %v121
  %v127 = vmul.f32 %v102, %v125
  %v128 = vmul.f32 %v106, %v121
  %v129 = vmul.f32 %v106, %v125
  %v130 = vadd.f32 %v96, %v126
  %v131 = vadd.f32 %v97, %v127
  %v132 = vadd.f32 %v98, %v128
  %v133 = vadd.f32 %v99, %v129
  %134 = vset.pattern.permute.xlu0 3
  %135 = vperm.xlu0 %134, %v14
  %v136 = vpop.permute.xlu0 %135
  %138 = vset.pattern.permute.xlu0 3
  %139 = vperm.xlu0 %138, %v15
  %v140 = vpop.permute.xlu0 %139
  %v142 = vlaneseq
  %v143 = vshrl.u32 %v142, 7
  %v144 = vsub.s32 3, %v143
  %v145 = vrot.slane %v18, %v144
  %v146 = vlaneseq
  %v147 = vshrl.u32 %v146, 7
  %v148 = vsub.s32 7, %v147
  %v149 = vrot.slane %v18, %v148
  %v152 = vlaneseq
  %v153 = vshrl.u32 %v152, 7
  %v154 = vsub.s32 3, %v153
  %v155 = vrot.slane %v145, %v154
  %v156 = vlaneseq
  %v157 = vshrl.u32 %v156, 7
  %v158 = vsub.s32 3, %v157
  %v159 = vrot.slane %v149, %v158
  %v160 = vmul.f32 %v136, %v155
  %v161 = vmul.f32 %v136, %v159
  %v162 = vmul.f32 %v140, %v155
  %v163 = vmul.f32 %v140, %v159
  %v164 = vadd.f32 %v130, %v160
  %v165 = vadd.f32 %v131, %v161
  %v166 = vadd.f32 %v132, %v162
  %v167 = vadd.f32 %v133, %v163
  %v168 = vxor.u32 %v166, 2147483648
  %v169 = vxor.u32 %v167, 2147483648
  %v170 = vmul.f32 %v168, 1.442695
  %v171 = vpow.pop %v170
  %v172 = vmul.f32 %v169, 1.442695
  %v173 = vpow.pop %v172
  %v174 = vadd.f32 %v171, 1.0
  %v175 = vadd.f32 %v173, 1.0
  %v176 = vrcp.pop %v174
  %v177 = vmul.f32 1.0, %v176
  %v178 = vrcp.pop %v175
  %v179 = vmul.f32 1.0, %v178
  %v180 = vmul.f32 %v164, %v177
  %v181 = vmul.f32 %v165, %v179
  %182 = vst [vmem:[%s3] sm:$0xff] %v180
  %183 = vst [vmem:[%s3 + $0x8] sm:$0xff] %v181
  %s184 = scalar_lea.vmem %s0, 8
  %v185 = vld [vmem:[%s184] sm:$0xff]
  %v187 = vlaneseq
  %v188 = vshrl.u32 %v187, 7
  %v189 = vsub.s32 0, %v188
  %v190 = vrot.slane %v185, %v189
  %v191 = vlaneseq
  %v192 = vshrl.u32 %v191, 7
  %v193 = vsub.s32 4, %v192
  %v194 = vrot.slane %v185, %v193
  %v197 = vlaneseq
  %v198 = vshrl.u32 %v197, 7
  %v199 = vsub.s32 0, %v198
  %v200 = vrot.slane %v190, %v199
  %v201 = vlaneseq
  %v202 = vshrl.u32 %v201, 7
  %v203 = vsub.s32 0, %v202
  %v204 = vrot.slane %v194, %v203
  %v205 = vmul.f32 %v22, %v200
  %v206 = vmul.f32 %v22, %v204
  %v207 = vmul.f32 %v27, %v200
  %v208 = vmul.f32 %v27, %v204
  %v209 = vadd.f32 %v205, %v55
  %v210 = vadd.f32 %v206, %v55
  %v211 = vadd.f32 %v207, %v60
  %v212 = vadd.f32 %v208, %v60
  %v213 = vlaneseq
  %v214 = vshrl.u32 %v213, 7
  %v215 = vsub.s32 1, %v214
  %v216 = vrot.slane %v185, %v215
  %v217 = vlaneseq
  %v218 = vshrl.u32 %v217, 7
  %v219 = vsub.s32 5, %v218
  %v220 = vrot.slane %v185, %v219
  %v223 = vlaneseq
  %v224 = vshrl.u32 %v223, 7
  %v225 = vsub.s32 1, %v224
  %v226 = vrot.slane %v216, %v225
  %v227 = vlaneseq
  %v228 = vshrl.u32 %v227, 7
  %v229 = vsub.s32 1, %v228
  %v230 = vrot.slane %v220, %v229
  %v231 = vmul.f32 %v68, %v226
  %v232 = vmul.f32 %v68, %v230
  %v233 = vmul.f32 %v72, %v226
  %v234 = vmul.f32 %v72, %v230
  %v235 = vadd.f32 %v209, %v231
  %v236 = vadd.f32 %v210, %v232
  %v237 = vadd.f32 %v211, %v233
  %v238 = vadd.f32 %v212, %v234
  %v239 = vlaneseq
  %v240 = vshrl.u32 %v239, 7
  %v241 = vsub.s32 2, %v240
  %v242 = vrot.slane %v185, %v241
  %v243 = vlaneseq
  %v244 = vshrl.u32 %v243, 7
  %v245 = vsub.s32 6, %v244
  %v246 = vrot.slane %v185, %v245
  %v249 = vlaneseq
  %v250 = vshrl.u32 %v249, 7
  %v251 = vsub.s32 2, %v250
  %v252 = vrot.slane %v242, %v251
  %v253 = vlaneseq
  %v254 = vshrl.u32 %v253, 7
  %v255 = vsub.s32 2, %v254
  %v256 = vrot.slane %v246, %v255
  %v257 = vmul.f32 %v102, %v252
  %v258 = vmul.f32 %v102, %v256
  %v259 = vmul.f32 %v106, %v252
  %v260 = vmul.f32 %v106, %v256
  %v261 = vadd.f32 %v235, %v257
  %v262 = vadd.f32 %v236, %v258
  %v263 = vadd.f32 %v237, %v259
  %v264 = vadd.f32 %v238, %v260
  %v265 = vlaneseq
  %v266 = vshrl.u32 %v265, 7
  %v267 = vsub.s32 3, %v266
  %v268 = vrot.slane %v185, %v267
  %v269 = vlaneseq
  %v270 = vshrl.u32 %v269, 7
  %v271 = vsub.s32 7, %v270
  %v272 = vrot.slane %v185, %v271
  %v275 = vlaneseq
  %v276 = vshrl.u32 %v275, 7
  %v277 = vsub.s32 3, %v276
  %v278 = vrot.slane %v268, %v277
  %v279 = vlaneseq
  %v280 = vshrl.u32 %v279, 7
  %v281 = vsub.s32 3, %v280
  %v282 = vrot.slane %v272, %v281
  %v283 = vmul.f32 %v136, %v278
  %v284 = vmul.f32 %v136, %v282
  %v285 = vmul.f32 %v140, %v278
  %v286 = vmul.f32 %v140, %v282
  %v287 = vadd.f32 %v261, %v283
  %v288 = vadd.f32 %v262, %v284
  %v289 = vadd.f32 %v263, %v285
  %v290 = vadd.f32 %v264, %v286
  %v291 = vxor.u32 %v289, 2147483648
  %v292 = vxor.u32 %v290, 2147483648
  %v293 = vmul.f32 %v291, 1.442695
  %v294 = vpow.pop %v293
  %v295 = vmul.f32 %v292, 1.442695
  %v296 = vpow.pop %v295
  %v297 = vadd.f32 %v294, 1.0
  %v298 = vadd.f32 %v296, 1.0
  %v299 = vrcp.pop %v297
  %v300 = vmul.f32 1.0, %v299
  %v301 = vrcp.pop %v298
  %v302 = vmul.f32 1.0, %v301
  %v303 = vmul.f32 %v287, %v300
  %v304 = vmul.f32 %v288, %v302
  %s305 = scalar_lea.vmem %s3, 16
  %306 = vst [vmem:[%s305] sm:$0xff] %v303
  %307 = vst [vmem:[%s305 + $0x8] sm:$0xff] %v304
  // Predicated region
  $region14: #{glu2d.1} parent=0 // pred_check
    _
  $region15: #{glu2d.1} parent=0 // pred_check_branch
    %309 = sbr.rel (0) target = $region17
  $region16: #{glu2d.1} parent=0 // pred_region
    _
  $region17: #{glu2d.1} parent=0 // pred_fallthru
    _
  // Predicated region
  $region18: #{glu2d.1} parent=0 // pred_check
    _
  $region19: #{glu2d.1} parent=0 // pred_check_branch
    %311 = sbr.rel (0) target = $region21
  $region20: #{glu2d.1} parent=0 // pred_region
    _
  $region21: #{glu2d.1} parent=0 // pred_fallthru
    _

</llo_original>
